<compile_context>
chip_gen: v6e
topology: v6e:2x2x1
jax: 0.10.0
libtpu: 0.0.40
codegen_flags: <defaults>
</compile_context>

<pallas_src>
import functools

import jax
import jax.numpy as jnp
from jax.experimental import pallas as pl
from jax.experimental.pallas import tpu as pltpu

_LANE = 128
_TARGET_BLOCK_BYTES = 6 << 20      # ~6 MiB VMEM per input block (x2 when double-buffered)
_MIN_SPLIT_BLOCK_BYTES = 1 << 20   # only split a lone i-block if each half still moves >=1 MiB
_VMEM_LIMIT_CAP = 32 << 20         # headroom vs v7x's 64 MiB physical VMEM


def _round_up(x, m):
    return (x + m - 1) // m * m


def _cdiv(a, b):
    return -(-a // b)


def _sublane_multiple(dtype):
    # f32 tiles as (8,128), bf16 as (16,128), int8/fp8 as (32,128).
    itemsize = jnp.dtype(dtype).itemsize
    return max(8, 32 // max(1, itemsize))


@functools.lru_cache(maxsize=None)
def _min_pallas_elements():
    # v7x's 3.2 TB/s HBM moves the Pallas-vs-fused-XLA crossover point up.
    try:
        kind = jax.devices()[0].device_kind.lower()
    except Exception:
        return 1 << 15
    return (1 << 17) if "v7" in kind else (1 << 15)


def _gap_kernel(x_ref, o_ref, acc_ref, *, inv_hw, hw, tile_hw, mask_hw):
    """Chunked spatial mean: accumulate f32 partial sums, scale once at the end."""
    k = pl.program_id(1)

    @pl.when(k == 0)
    def _init():
        acc_ref[...] = jnp.zeros_like(acc_ref)

    x = x_ref[...]
    if mask_hw:
        # Ragged last spatial chunk: zero the out-of-range lanes before the
        # reduce (the predicate is all-true for earlier chunks; pure VPU work,
        # free while HBM-bound).
        col = jax.lax.broadcasted_iota(jnp.int32, x.shape, dimension=1)
        x = jnp.where(k * tile_hw + col < hw, x, 0)

    # Sum this chunk in f32 without materializing a full-width f32 copy.
    acc_ref[...] += jnp.sum(x, axis=-1, keepdims=True, dtype=jnp.float32)

    @pl.when(k == pl.num_programs(1) - 1)
    def _finalize():
        o_ref[...] = (acc_ref[...] * inv_hw).astype(o_ref.dtype)


def _select_tiles(nc, hw, itemsize, sub):
    """Pick (tile_nc, tile_hw) to fill ~_TARGET_BLOCK_BYTES of VMEM per block."""
    lane_row_bytes = _round_up(hw, _LANE) * itemsize  # VMEM bytes per row with full hw
    rows_budget = _TARGET_BLOCK_BYTES // lane_row_bytes

    if rows_budget >= sub:
        # Common case: whole spatial extent in one block (no hw chunking, no
        # padding, no masking); grow the row count to fill the block budget.
        tile_hw = hw
        max_rows = (rows_budget // sub) * sub
        tile_nc = nc if nc <= max_rows else max_rows
        # Keep >=2 blocks on the 'parallel' axis (megacore / v7x's 2 TCs)
        # whenever each half still carries enough HBM traffic per step.
        if tile_nc == nc and nc > sub:
            half = _round_up(_cdiv(nc, 2), sub)
            if half < nc and half * hw * itemsize >= _MIN_SPLIT_BLOCK_BYTES:
                tile_nc = half
    else:
        # Very large spatial maps: chunk hw in 128-lane multiples at minimal rows.
        tile_nc = nc if nc < sub else sub
        row_bytes = _TARGET_BLOCK_BYTES // sub
        tile_hw = max(_LANE, (row_bytes // itemsize) // _LANE * _LANE)
        tile_hw = min(tile_hw, _round_up(hw, _LANE))
    return tile_nc, tile_hw


def _gap_pallas(x, *, tile_nc=None, tile_hw=None):
    """Global average pool an NCHW tensor via Pallas -> (N, C)."""
    n, c, h, w = x.shape
    nc, hw = n * c, h * w
    x2 = x.reshape(nc, hw)  # free reshape on contiguous NCHW

    itemsize = jnp.dtype(x.dtype).itemsize
    sub = _sublane_multiple(x.dtype)

    auto_nc, auto_hw = _select_tiles(nc, hw, itemsize, sub)
    if tile_nc is None:          # overrides are test hooks
        tile_nc = auto_nc
    if tile_hw is None:
        tile_hw = auto_hw

    grid = (_cdiv(nc, tile_nc), _cdiv(hw, tile_hw))
    mask_hw = (hw % tile_hw) != 0

    # VMEM footprint accounts for (sublane, lane) layout padding of the block.
    vmem_block = _round_up(tile_nc, sub) * _round_up(tile_hw, _LANE) * itemsize
    vmem_limit = int(min(_VMEM_LIMIT_CAP, max(12 << 20, 3 * vmem_block + (2 << 20))))

    out = pl.pallas_call(
        functools.partial(
            _gap_kernel,
            inv_hw=1.0 / float(hw),
            hw=hw,
            tile_hw=tile_hw,
            mask_hw=mask_hw,
        ),
        out_shape=jax.ShapeDtypeStruct((nc, 1), x.dtype),
        grid_spec=pltpu.PrefetchScalarGridSpec(
            num_scalar_prefetch=0,
            grid=grid,
            in_specs=[pl.BlockSpec((tile_nc, tile_hw), lambda i, k: (i, k))],
            # Same output block across the reduction axis -> resident across k.
            out_specs=pl.BlockSpec((tile_nc, 1), lambda i, k: (i, 0)),
            scratch_shapes=[pltpu.VMEM((tile_nc, 1), jnp.float32)],
        ),
        compiler_params=pltpu.CompilerParams(
            dimension_semantics=("parallel", "arbitrary"),
            vmem_limit_bytes=vmem_limit,
        ),
    )(x2)

    return out.reshape(n, c)


def _gap_single(x, *, min_pallas_elements=None):
    thr = _min_pallas_elements() if min_pallas_elements is None else min_pallas_elements
    if x.size < thr:
        # Tiny feature maps: per-pallas_call + grid-setup overhead dominates,
        # a fused XLA reduce is strictly faster.
        return jnp.mean(x, axis=(2, 3))
    return _gap_pallas(x)


def global_average_pooling(inputs, *, min_pallas_elements=None):
    """Mirrors GlobalAveragePooling.forward: tensor or tuple/list of tensors."""
    if isinstance(inputs, (tuple, list)):
        return tuple(
            _gap_single(x, min_pallas_elements=min_pallas_elements) for x in inputs
        )
    elif isinstance(inputs, jnp.ndarray) or hasattr(inputs, "shape"):
        return _gap_single(inputs, min_pallas_elements=min_pallas_elements)
    else:
        raise TypeError("neck inputs should be sequence or jax array")


if __name__ == "__main__":
    key = jax.random.PRNGKey(0)
    k1, k2, k3, k4, k5 = jax.random.split(key, 5)

    # 1) Small NCHW input through the module-level dispatch (XLA fast path).
    x = jax.random.normal(k1, (2, 4, 16, 16), dtype=jnp.float32)
    out = jax.block_until_ready(global_average_pooling(x))
    ref = jnp.mean(x, axis=(2, 3))
    assert out.shape == (2, 4)
    assert jnp.allclose(out, ref, atol=1e-5, rtol=1e-5)

    # 2) Same input forced through the Pallas kernel (single-block grid).
    out_p = jax.block_until_ready(_gap_pallas(x))
    assert out_p.shape == (2, 4)
    assert jnp.allclose(out_p, ref, atol=1e-5, rtol=1e-5)

    # 3) Chunked + masked spatial reduction: hw=500 is not a multiple of 128;
    #    small forced tiles exercise multi-step f32 accumulation and the
    #    ragged-lane iota mask (no jnp.pad anywhere).
    x2 = jax.random.normal(k2, (2, 24, 20, 25), dtype=jnp.float32)
    out2 = jax.block_until_ready(_gap_pallas(x2, tile_nc=8, tile_hw=128))
    ref2 = jnp.mean(x2, axis=(2, 3))
    assert out2.shape == (2, 24)
    assert jnp.allclose(out2, ref2, atol=1e-5, rtol=1e-5)

    # 3b) Same input on the default (unchunked, pad-free) tile selection.
    out2b = jax.block_until_ready(_gap_pallas(x2))
    assert jnp.allclose(out2b, ref2, atol=1e-5, rtol=1e-5)

    # 4) Ragged leading axis: nc=30 with forced tile_nc=8 -> overhanging last
    #    i-block (masked boundary store), full-extent hw=99 (non-128-multiple).
    x3 = jax.random.normal(k3, (3, 10, 9, 11), dtype=jnp.float32)
    out3 = jax.block_until_ready(_gap_pallas(x3, tile_nc=8))
    assert out3.shape == (3, 10)
    assert jnp.allclose(out3, jnp.mean(x3, axis=(2, 3)), atol=1e-5, rtol=1e-5)

    # 5) bf16 feature maps: dtype-aware (16,128) sublane rounding, f32 accum.
    x4 = jax.random.normal(k4, (2, 8, 16, 16), dtype=jnp.float32).astype(jnp.bfloat16)
    out4 = jax.block_until_ready(_gap_pallas(x4))
    ref4 = jnp.mean(x4.astype(jnp.float32), axis=(2, 3))
    assert out4.shape == (2, 8) and out4.dtype == jnp.bfloat16
    assert jnp.allclose(out4.astype(jnp.float32), ref4, atol=2e-2, rtol=2e-2)

    # 6) Tuple-of-tensors input (multi-scale feature maps), like FPN outputs.
    x5 = jax.random.normal(k5, (2, 8, 8, 8), dtype=jnp.float32)
    outs = jax.block_until_ready(global_average_pooling((x, x5)))
    assert isinstance(outs, tuple) and len(outs) == 2
    assert outs[0].shape == (2, 4) and outs[1].shape == (2, 8)
    assert jnp.allclose(outs[1], jnp.mean(x5, axis=(2, 3)), atol=1e-5, rtol=1e-5)

    print("KERNEL_OK")
</pallas_src>

<mosaic_0001>
module attributes {stable_mosaic.version = 11 : i64} {
  func.func @_gap_kernel(%arg0: i32, %arg1: i32, %arg2: memref<8x256xf32, #tpu.memory_space<vmem>>, %arg3: memref<8x1xf32, #tpu.memory_space<vmem>>, %arg4: memref<8x1xf32, #tpu.memory_space<vmem>>) attributes {dimension_semantics = [#tpu.dimension_semantics<parallel>, #tpu.dimension_semantics<arbitrary>], iteration_bounds = array<i64: 1, 1>, scalar_prefetch = 0 : i64, scratch_operands = 1 : i64, tpu.core_type = #tpu.core_type<tc>, window_params = [{transform_indices = @transform_0, window_bounds = array<i64: 8, 256>}, {transform_indices = @transform_1, window_bounds = array<i64: 8, 1>}]} {
    %c0_i32 = arith.constant 0 : i32
    %0 = arith.cmpi eq, %arg1, %c0_i32 : i32
    %1 = arith.extui %0 : i1 to i32
    %c0_i32_0 = arith.constant 0 : i32
    %2 = arith.cmpi ne, %1, %c0_i32_0 : i32
    scf.if %2 {
      %cst_8 = arith.constant 0.000000e+00 : f32
      %12 = vector.broadcast %cst_8 : f32 to vector<8x1xf32>
      %c0_9 = arith.constant 0 : index
      %c0_10 = arith.constant 0 : index
      %13 = vector.load %arg4[%c0_9, %c0_10] : memref<8x1xf32, #tpu.memory_space<vmem>>, vector<8x1xf32>
      tpu.vector_store %arg4[%c0_9, %c0_10], %12 {strides = array<i32>} : memref<8x1xf32, #tpu.memory_space<vmem>>, vector<8x1xf32>,
    } else {
    }
    %c0 = arith.constant 0 : index
    %c0_1 = arith.constant 0 : index
    %3 = vector.load %arg2[%c0, %c0_1] : memref<8x256xf32, #tpu.memory_space<vmem>>, vector<8x256xf32>
    %c0_2 = arith.constant 0 : index
    %c0_3 = arith.constant 0 : index
    %4 = vector.load %arg4[%c0_2, %c0_3] : memref<8x1xf32, #tpu.memory_space<vmem>>, vector<8x1xf32>
    %cst = arith.constant dense<0.000000e+00> : vector<8xf32>
    %5 = vector.multi_reduction <add>, %3, %cst [1] : vector<8x256xf32> to vector<8xf32>
    %6 = vector.shape_cast %5 : vector<8xf32> to vector<8x1xf32>
    %7 = arith.addf %4, %6 : vector<8x1xf32>
    %c0_4 = arith.constant 0 : index
    %c0_5 = arith.constant 0 : index
    %8 = vector.load %arg4[%c0_4, %c0_5] : memref<8x1xf32, #tpu.memory_space<vmem>>, vector<8x1xf32>
    tpu.vector_store %arg4[%c0_4, %c0_5], %7 {strides = array<i32>} : memref<8x1xf32, #tpu.memory_space<vmem>>, vector<8x1xf32>,
    %c0_i32_6 = arith.constant 0 : i32
    %9 = arith.cmpi eq, %arg1, %c0_i32_6 : i32
    %10 = arith.extui %9 : i1 to i32
    %c0_i32_7 = arith.constant 0 : i32
    %11 = arith.cmpi ne, %10, %c0_i32_7 : i32
    scf.if %11 {
      %c0_8 = arith.constant 0 : index
      %c0_9 = arith.constant 0 : index
      %12 = vector.load %arg4[%c0_8, %c0_9] : memref<8x1xf32, #tpu.memory_space<vmem>>, vector<8x1xf32>
      %cst_10 = arith.constant 3.906250e-03 : f32
      %13 = vector.broadcast %cst_10 : f32 to vector<8x1xf32>
      %14 = arith.mulf %12, %13 : vector<8x1xf32>
      %c0_11 = arith.constant 0 : index
      %c0_12 = arith.constant 0 : index
      %15 = vector.load %arg3[%c0_11, %c0_12] : memref<8x1xf32, #tpu.memory_space<vmem>>, vector<8x1xf32>
      tpu.vector_store %arg3[%c0_11, %c0_12], %14 {strides = array<i32>} : memref<8x1xf32, #tpu.memory_space<vmem>>, vector<8x1xf32>,
    } else {
    }
    return
  }
  func.func @transform_0(%arg0: i32, %arg1: i32) -> (i32, i32) {
    %c0_i32 = arith.constant 0 : i32
    return %arg0, %arg1 : i32, i32
  }
  func.func @transform_1(%arg0: i32, %arg1: i32) -> (i32, i32) {
    %c0_i32 = arith.constant 0 : i32
    %c0_i32_0 = arith.constant 0 : i32
    return %arg0, %c0_i32 : i32, i32
  }
}

</mosaic_0001>

<llo_original>
// kernel: tpu_custom_call.1
$region0: #{tpu_custom_call.1}
  #allocation0 [shape = 'u32[]', space=smem, size = 0x4, offset = 0x4, fixed_abs, tag = 'smem constant byte address 0x4 - core index']
  #allocation1 [shape = 'u32[144,128]{1,0:T(1,128)}', space=vmem, size = 0x12000, scoped, tag = 'internal scratch']
  #allocation2 [shape = 'f32[8,1]{1,0:T(8,128)}', space=vmem, size = 0x1000, scoped, tag = 'scratch operand']
  %s0 = inlined_call_operand.hbm [shape: f32[8,256], index: 0, kind: input, shape index: {}]
  %s1 = inlined_call_operand.vmem [shape: f32[8,1], index: 1, kind: output, shape index: {}]
  %s2 = sld [smem:[#allocation0]]
  $region26: #{tpu_custom_call.1} parent=0
    _
  %s4 = ssub.s32 1, %s2
  %s5 = scalar_select 0, %s4, %s2
  $region1: #{tpu_custom_call.1} parent=0
    #allocation3 [shape = 'u8[8192]{0}', space=vmem, size = 0x2000, scoped, tag = 'input window, operand 0, single buffered']
    #allocation4 [shape = 's32[1]{0}', space=sflag, size = 0x4, scoped, tag = 'scoped memory for tpu_custom_call.1']
    %6 = vsyncpa [#allocation4], 0
    // Predicated region
    $region2: #{tpu_custom_call.1} parent=1 // pred_check
      _
    $region3: #{tpu_custom_call.1} parent=1 // pred_check_branch
      %8 = sbr.rel (0) target = $region5
    $region4: #{tpu_custom_call.1} parent=1 // pred_region
      %s10 = ssub.s32 256, 256
      %11 = vsyncadd [#allocation4], %s10
      %s13 = sshll.u32 [#allocation3], 4
      %s14 = int_to_ptr.vmem [resolvable:$true] %s13
      %16 = dma.hbm_to_vmem [thread:$0]  %s0, 256, %s14, [#allocation4]
    $region5: #{tpu_custom_call.1} parent=1 // pred_fallthru
      _
    // Predicated region
    $region6: #{tpu_custom_call.1} parent=1 // pred_check
      _
    $region7: #{tpu_custom_call.1} parent=1 // pred_check_branch
      %18 = sbr.rel (0) target = $region9
    $region8: #{tpu_custom_call.1} parent=1 // pred_region
      %19 = dma.done [#allocation4], 256
    $region9: #{tpu_custom_call.1} parent=1 // pred_fallthru
      _
    %p20 = scmp.eq.s32.totalorder 0, 0
    // Predicated region
    $region10: #{tpu_custom_call.1} parent=1 // pred_check
      %p21 = pneg %p20
    $region11: #{tpu_custom_call.1} parent=1 // pred_check_branch
      %23 = sbr.rel (%p21) target = $region13
    $region12: #{tpu_custom_call.1} parent=1 // pred_region
      %vm24 = vcmask 7168
      %25 = vst.msk [vmem:[#allocation2] sm:$0xff] %vm24, 0.0
    $region13: #{tpu_custom_call.1} parent=1 // pred_fallthru
      _
    %v26 = vld [vmem:[#allocation3] sm:$0xff]
    %v27 = vld [vmem:[#allocation3 + $0x8] sm:$0xff]
    %v28 = vld [vmem:[#allocation2] sm:$0xff]
    %v29 = vadd.f32 %v26, %v27
    %30 = vadd.xlane.f32.xlu0 %v29
    %v31 = vpop.xlane.xlu0 %30
    %v32 = vadd.f32 %v28, %v31
    %vm33 = vcmask 7168
    %34 = vst.msk [vmem:[#allocation2] sm:$0xff] %vm33, %v32
    // Predicated region
    $region14: #{tpu_custom_call.1} parent=1 // pred_check
      %p35 = pneg %p20
    $region15: #{tpu_custom_call.1} parent=1 // pred_check_branch
      %37 = sbr.rel (%p35) target = $region17
    $region16: #{tpu_custom_call.1} parent=1 // pred_region
      %v38 = vld [vmem:[#allocation2] sm:$0xff]
      %v39 = vmul.f32 %v38, 0.00390625
      %40 = vst.msk [vmem:[%s1] sm:$0xff] %vm33, %v39
    $region17: #{tpu_custom_call.1} parent=1 // pred_fallthru
      _
    // Predicated region
    $region18: #{tpu_custom_call.1} parent=1 // pred_check
      _
    $region19: #{tpu_custom_call.1} parent=1 // pred_check_branch
      %42 = sbr.rel (0) target = $region21
    $region20: #{tpu_custom_call.1} parent=1 // pred_region
      _
    $region21: #{tpu_custom_call.1} parent=1 // pred_fallthru
      _
    // Predicated region
    $region22: #{tpu_custom_call.1} parent=1 // pred_check
      _
    $region23: #{tpu_custom_call.1} parent=1 // pred_check_branch
      %44 = sbr.rel (0) target = $region25
    $region24: #{tpu_custom_call.1} parent=1 // pred_region
      _
    $region25: #{tpu_custom_call.1} parent=1 // pred_fallthru
      _
    %45 = vsyncpa [#allocation4], 1

</llo_original>
